<compile_context>
chip_gen: v7x
topology: tpu7x:2x2x1
jax: 0.10.0
libtpu: 0.0.40
codegen_flags: <defaults>
</compile_context>

<pallas_src>
import jax
import jax.numpy as jnp
from jax.experimental import pallas as pl
from jax.experimental.pallas import tpu as pltpu

GEM_EPS = 1e-6


def _pick_tile(total, align, target):
    """Largest multiple of `align` that divides `total` and is <= target.

    Falls back to `total` (a full-extent block is always a legal block shape).
    """
    if total <= target:
        return total
    best = None
    t = align
    while t <= target:
        if total % t == 0:
            best = t
        t += align
    return best if best is not None else total


def _vmem_limit_bytes():
    """Generation-aware VMEM limit: 64 MiB on 128-MiB parts (v5e/v6e),
    40 MiB on v7x (64 MiB physical), conservative fallback otherwise."""
    mib = 1024 * 1024
    try:
        cap = int(pltpu.get_tpu_info().vmem_capacity_bytes)
    except Exception:
        cap = 64 * mib
    if cap >= 128 * mib:
        return 64 * mib
    if cap >= 64 * mib:
        return 40 * mib
    return 32 * mib


def _make_kernel(hw_total):
    inv_hw = 1.0 / float(hw_total)

    def kernel(p_ref, x_ref, out_ref, sum_acc, max_acc, pow_acc):
        # p_ref:   (1,)  f32 in SMEM                      (GeM power)
        # x_ref:   (1, c_tile, hw_tile) in VMEM           (input tile, HW on lanes)
        # out_ref: (1, 3, c_tile, 1) in VMEM              (avg / max / gem rows)
        # *_acc:   (c_tile, 1) f32 VMEM scratch accumulators
        k = pl.program_id(2)
        nk = pl.num_programs(2)

        @pl.when(k == 0)
        def _():
            sum_acc[...] = jnp.zeros_like(sum_acc)
            max_acc[...] = jnp.full_like(max_acc, -jnp.inf)
            pow_acc[...] = jnp.zeros_like(pow_acc)

        x = x_ref[0].astype(jnp.float32)  # (c_tile, hw_tile)
        p = p_ref[0]

        # avg / max: lane (XLU) reductions into per-channel accumulators.
        sum_acc[...] += jnp.sum(x, axis=-1, keepdims=True)
        max_acc[...] = jnp.maximum(max_acc[...], jnp.max(x, axis=-1, keepdims=True))

        # GeM: clamp then raise to p.  Specialize the common p==3 case to pure
        # VPU multiplies so the EUP (exp/log) stays off the hot loop.
        xc = jnp.maximum(x, GEM_EPS)
        use_cube = jnp.abs(p - 3.0) < 1e-6
        # NOTE: for p within 1e-6 of (but not exactly) 3 the cube is paired with
        # the exact 1/p root below; the error is bounded by the threshold.

        @pl.when(use_cube)
        def _():
            pow_acc[...] += jnp.sum(xc * xc * xc, axis=-1, keepdims=True)

        @pl.when(jnp.logical_not(use_cube))
        def _():
            pow_acc[...] += jnp.sum(jnp.power(xc, p), axis=-1, keepdims=True)

        # Finalize once per (n, c) tile: 1/HW scale and the 1/p root are applied
        # only to the tiny (c_tile, 1) accumulators, then one small store.
        @pl.when(k == nk - 1)
        def _():
            avg = sum_acc[...] * inv_hw
            gem = jnp.power(pow_acc[...] * inv_hw, 1.0 / p)
            out_ref[0, 0, :, :] = avg.astype(out_ref.dtype)
            out_ref[0, 1, :, :] = max_acc[...].astype(out_ref.dtype)
            out_ref[0, 2, :, :] = gem.astype(out_ref.dtype)

    return kernel


def triple_pool2d(x, p_param, *, c_tile=None, hw_tile=None):
    """x: (N, C, H, W) NCHW, p_param: (1,) f32.  Returns (N, 3*C, 1, 1)."""
    N, C, H, W = x.shape
    HW = H * W

    # Free reshape: NCHW is already contiguous over (H, W) — no data movement,
    # no extra HBM pass.  HW goes to lanes, C to sublanes.
    x3 = x.reshape(N, C, HW)

    itemsize = jnp.dtype(x.dtype).itemsize
    c_align = {4: 8, 2: 16, 1: 32}.get(itemsize, 8)

    # ~8 MiB per input block (double-buffered by the pipeline => ~16 MiB),
    # well inside the generation-aware VMEM limit below.
    budget = 8 * 1024 * 1024

    if hw_tile is None:
        # Prefer a full-extent HW block (single reduction step) when it fits;
        # otherwise the largest 128-multiple divisor.  For tiny HW (e.g. 7x7
        # heads) the full-extent block is still legal, just less lane-dense.
        hw_tile = _pick_tile(HW, 128, max(128, budget // (c_align * itemsize)))
    if c_tile is None:
        c_tile = _pick_tile(C, c_align, max(c_align, budget // (hw_tile * itemsize)))
        # v7x has 2 TensorCores: ensure the parallel (N, C-tiles) axes provide
        # at least 2 iterations whenever C can be split further.
        if N * (C // c_tile) < 2:
            half = _pick_tile(C, c_align, max(c_align, c_tile // 2))
            if half < c_tile and C % half == 0:
                c_tile = half

    assert C % c_tile == 0 and HW % hw_tile == 0, (C, c_tile, HW, hw_tile)

    grid = (N, C // c_tile, HW // hw_tile)

    cost = pl.CostEstimate(
        flops=6 * N * C * HW,
        transcendentals=N * 3 * C,  # final 1/p roots (generic-p path adds more)
        bytes_accessed=N * C * HW * itemsize + N * 3 * C * itemsize + 4,
    )

    out = pl.pallas_call(
        _make_kernel(HW),
        out_shape=jax.ShapeDtypeStruct((N, 3, C, 1), x.dtype),
        grid=grid,
        in_specs=[
            pl.BlockSpec(memory_space=pltpu.MemorySpace.SMEM),               # p scalar
            pl.BlockSpec((1, c_tile, hw_tile), lambda n, c, k: (n, c, k)),   # x tile
        ],
        out_specs=pl.BlockSpec((1, 3, c_tile, 1), lambda n, c, k: (n, 0, c, 0)),
        scratch_shapes=[
            pltpu.VMEM((c_tile, 1), jnp.float32),  # running sum
            pltpu.VMEM((c_tile, 1), jnp.float32),  # running max
            pltpu.VMEM((c_tile, 1), jnp.float32),  # running pow-sum (GeM)
        ],
        compiler_params=pltpu.CompilerParams(
            dimension_semantics=("parallel", "parallel", "arbitrary"),
            vmem_limit_bytes=_vmem_limit_bytes(),
        ),
        cost_estimate=cost,
    )(p_param, x3)

    # (N, 3, C, 1) -> channels [avg_0..avg_{C-1}, max_0.., gem_0..] per batch,
    # matching torch.cat([avg_pool, max_pool, gem_pool], dim=1).
    return out.reshape(N, 3 * C, 1, 1)


def _reference(x, p_param):
    """Pure-JAX reference matching the PyTorch forward."""
    p = p_param[0]
    avg = jnp.mean(x, axis=(-2, -1), keepdims=True)
    mx = jnp.max(x, axis=(-2, -1), keepdims=True)
    xc = jnp.maximum(x, GEM_EPS)
    gem = jnp.power(jnp.mean(jnp.power(xc, p), axis=(-2, -1), keepdims=True), 1.0 / p)
    return jnp.concatenate([avg, mx, gem], axis=1)


if __name__ == "__main__":
    key = jax.random.PRNGKey(0)
    N, C, H, W = 2, 4, 16, 16
    x = jax.random.normal(key, (N, C, H, W), dtype=jnp.float32)

    # GeM's learnable power, deterministically initialized to 3.0 (as in __init__).
    p_param = jnp.ones((1,), dtype=jnp.float32) * 3.0

    ref = _reference(x, p_param)

    # Default tiling (full-extent HW block, single reduction step).
    out = triple_pool2d(x, p_param)
    jax.block_until_ready(out)
    assert out.shape == (N, 3 * C, 1, 1), out.shape
    assert jnp.allclose(out, ref, atol=1e-4, rtol=1e-4), "mismatch vs reference (default tiles)"

    # Force a multi-step reduction grid to exercise the accumulator path.
    out_tiled = triple_pool2d(x, p_param, hw_tile=128)
    jax.block_until_ready(out_tiled)
    assert jnp.allclose(out_tiled, ref, atol=1e-4, rtol=1e-4), "mismatch vs reference (hw tiles)"

    # Non-integer p exercises the generic jnp.power branch.
    p_generic = jnp.ones((1,), dtype=jnp.float32) * 2.5
    out_gen = triple_pool2d(x, p_generic, hw_tile=128)
    jax.block_until_ready(out_gen)
    assert jnp.allclose(out_gen, _reference(x, p_generic), atol=1e-4, rtol=1e-4), \
        "mismatch vs reference (generic p)"

    print("KERNEL_OK")
</pallas_src>

<mosaic_0001>
module attributes {stable_mosaic.version = 11 : i64} {
  func.func @kernel(%arg0: i32, %arg1: i32, %arg2: i32, %arg3: memref<1xf32, #tpu.memory_space<smem>>, %arg4: memref<1x4x256xf32, #tpu.memory_space<vmem>>, %arg5: memref<1x3x4x1xf32, #tpu.memory_space<vmem>>, %arg6: memref<4x1xf32, #tpu.memory_space<vmem>>, %arg7: memref<4x1xf32, #tpu.memory_space<vmem>>, %arg8: memref<4x1xf32, #tpu.memory_space<vmem>>) attributes {dimension_semantics = [#tpu.dimension_semantics<parallel>, #tpu.dimension_semantics<parallel>, #tpu.dimension_semantics<arbitrary>], iteration_bounds = array<i64: 2, 1, 1>, scalar_prefetch = 0 : i64, scratch_operands = 3 : i64, tpu.core_type = #tpu.core_type<tc>, window_params = [{transform_indices = @transform_0, window_bounds = array<i64: 1>}, {transform_indices = @transform_1, window_bounds = array<i64: 1, 4, 256>}, {transform_indices = @transform_2, window_bounds = array<i64: 1, 3, 4, 1>}]} {
    %c0_i32 = arith.constant 0 : i32
    %0 = arith.cmpi eq, %arg2, %c0_i32 : i32
    %1 = arith.extui %0 : i1 to i32
    %c0_i32_0 = arith.constant 0 : i32
    %2 = arith.cmpi ne, %1, %c0_i32_0 : i32
    scf.if %2 {
      %cst_20 = arith.constant 0.000000e+00 : f32
      %29 = vector.broadcast %cst_20 : f32 to vector<4x1xf32>
      %c0_21 = arith.constant 0 : index
      %c0_22 = arith.constant 0 : index
      %30 = vector.load %arg6[%c0_21, %c0_22] : memref<4x1xf32, #tpu.memory_space<vmem>>, vector<4x1xf32>
      tpu.vector_store %arg6[%c0_21, %c0_22], %29 {strides = array<i32>} : memref<4x1xf32, #tpu.memory_space<vmem>>, vector<4x1xf32>,
      %cst_23 = arith.constant 0xFF800000 : f32
      %31 = vector.broadcast %cst_23 : f32 to vector<4x1xf32>
      %c0_24 = arith.constant 0 : index
      %c0_25 = arith.constant 0 : index
      %32 = vector.load %arg7[%c0_24, %c0_25] : memref<4x1xf32, #tpu.memory_space<vmem>>, vector<4x1xf32>
      tpu.vector_store %arg7[%c0_24, %c0_25], %31 {strides = array<i32>} : memref<4x1xf32, #tpu.memory_space<vmem>>, vector<4x1xf32>,
      %cst_26 = arith.constant 0.000000e+00 : f32
      %33 = vector.broadcast %cst_26 : f32 to vector<4x1xf32>
      %c0_27 = arith.constant 0 : index
      %c0_28 = arith.constant 0 : index
      %34 = vector.load %arg8[%c0_27, %c0_28] : memref<4x1xf32, #tpu.memory_space<vmem>>, vector<4x1xf32>
      tpu.vector_store %arg8[%c0_27, %c0_28], %33 {strides = array<i32>} : memref<4x1xf32, #tpu.memory_space<vmem>>, vector<4x1xf32>,
    } else {
    }
    %c0 = arith.constant 0 : index
    %c0_1 = arith.constant 0 : index
    %c0_2 = arith.constant 0 : index
    %3 = vector.load %arg4[%c0, %c0_1, %c0_2] : memref<1x4x256xf32, #tpu.memory_space<vmem>>, vector<1x4x256xf32>
    %4 = vector.shape_cast %3 : vector<1x4x256xf32> to vector<4x256xf32>
    %c0_3 = arith.constant 0 : index
    %5 = memref.load %arg3[%c0_3] : memref<1xf32, #tpu.memory_space<smem>>
    %c0_4 = arith.constant 0 : index
    %c0_5 = arith.constant 0 : index
    %6 = vector.load %arg6[%c0_4, %c0_5] : memref<4x1xf32, #tpu.memory_space<vmem>>, vector<4x1xf32>
    %cst = arith.constant dense<0.000000e+00> : vector<4xf32>
    %7 = vector.multi_reduction <add>, %4, %cst [1] : vector<4x256xf32> to vector<4xf32>
    %8 = vector.shape_cast %7 : vector<4xf32> to vector<4x1xf32>
    %9 = arith.addf %6, %8 : vector<4x1xf32>
    %c0_6 = arith.constant 0 : index
    %c0_7 = arith.constant 0 : index
    %10 = vector.load %arg6[%c0_6, %c0_7] : memref<4x1xf32, #tpu.memory_space<vmem>>, vector<4x1xf32>
    tpu.vector_store %arg6[%c0_6, %c0_7], %9 {strides = array<i32>} : memref<4x1xf32, #tpu.memory_space<vmem>>, vector<4x1xf32>,
    %c0_8 = arith.constant 0 : index
    %c0_9 = arith.constant 0 : index
    %11 = vector.load %arg7[%c0_8, %c0_9] : memref<4x1xf32, #tpu.memory_space<vmem>>, vector<4x1xf32>
    %cst_10 = arith.constant dense<0xFF800000> : vector<4xf32>
    %12 = vector.multi_reduction <maximumf>, %4, %cst_10 [1] : vector<4x256xf32> to vector<4xf32>
    %13 = vector.shape_cast %12 : vector<4xf32> to vector<4x1xf32>
    %14 = arith.maximumf %11, %13 : vector<4x1xf32>
    %c0_11 = arith.constant 0 : index
    %c0_12 = arith.constant 0 : index
    %15 = vector.load %arg7[%c0_11, %c0_12] : memref<4x1xf32, #tpu.memory_space<vmem>>, vector<4x1xf32>
    tpu.vector_store %arg7[%c0_11, %c0_12], %14 {strides = array<i32>} : memref<4x1xf32, #tpu.memory_space<vmem>>, vector<4x1xf32>,
    %cst_13 = arith.constant 9.99999997E-7 : f32
    %16 = vector.broadcast %cst_13 : f32 to vector<4x256xf32>
    %17 = arith.maximumf %4, %16 : vector<4x256xf32>
    %cst_14 = arith.constant 3.000000e+00 : f32
    %18 = arith.subf %5, %cst_14 : f32
    %19 = math.absf %18 : f32
    %cst_15 = arith.constant 9.99999997E-7 : f32
    %20 = arith.cmpf olt, %19, %cst_15 : f32
    %21 = arith.extui %20 : i1 to i32
    %c0_i32_16 = arith.constant 0 : i32
    %22 = arith.cmpi ne, %21, %c0_i32_16 : i32
    scf.if %22 {
      %c0_20 = arith.constant 0 : index
      %c0_21 = arith.constant 0 : index
      %29 = vector.load %arg8[%c0_20, %c0_21] : memref<4x1xf32, #tpu.memory_space<vmem>>, vector<4x1xf32>
      %30 = arith.mulf %17, %17 : vector<4x256xf32>
      %31 = arith.mulf %30, %17 : vector<4x256xf32>
      %cst_22 = arith.constant dense<0.000000e+00> : vector<4xf32>
      %32 = vector.multi_reduction <add>, %31, %cst_22 [1] : vector<4x256xf32> to vector<4xf32>
      %33 = vector.shape_cast %32 : vector<4xf32> to vector<4x1xf32>
      %34 = arith.addf %29, %33 : vector<4x1xf32>
      %c0_23 = arith.constant 0 : index
      %c0_24 = arith.constant 0 : index
      %35 = vector.load %arg8[%c0_23, %c0_24] : memref<4x1xf32, #tpu.memory_space<vmem>>, vector<4x1xf32>
      tpu.vector_store %arg8[%c0_23, %c0_24], %34 {strides = array<i32>} : memref<4x1xf32, #tpu.memory_space<vmem>>, vector<4x1xf32>,
    } else {
    }
    %true = arith.constant true
    %23 = arith.xori %20, %true : i1
    %24 = arith.extui %23 : i1 to i32
    %c0_i32_17 = arith.constant 0 : i32
    %25 = arith.cmpi ne, %24, %c0_i32_17 : i32
    scf.if %25 {
      %c0_20 = arith.constant 0 : index
      %c0_21 = arith.constant 0 : index
      %29 = vector.load %arg8[%c0_20, %c0_21] : memref<4x1xf32, #tpu.memory_space<vmem>>, vector<4x1xf32>
      %30 = vector.broadcast %5 : f32 to vector<4x256xf32>
      %31 = math.powf %17, %30 : vector<4x256xf32>
      %cst_22 = arith.constant dense<0.000000e+00> : vector<4xf32>
      %32 = vector.multi_reduction <add>, %31, %cst_22 [1] : vector<4x256xf32> to vector<4xf32>
      %33 = vector.shape_cast %32 : vector<4xf32> to vector<4x1xf32>
      %34 = arith.addf %29, %33 : vector<4x1xf32>
      %c0_23 = arith.constant 0 : index
      %c0_24 = arith.constant 0 : index
      %35 = vector.load %arg8[%c0_23, %c0_24] : memref<4x1xf32, #tpu.memory_space<vmem>>, vector<4x1xf32>
      tpu.vector_store %arg8[%c0_23, %c0_24], %34 {strides = array<i32>} : memref<4x1xf32, #tpu.memory_space<vmem>>, vector<4x1xf32>,
    } else {
    }
    %c0_i32_18 = arith.constant 0 : i32
    %26 = arith.cmpi eq, %arg2, %c0_i32_18 : i32
    %27 = arith.extui %26 : i1 to i32
    %c0_i32_19 = arith.constant 0 : i32
    %28 = arith.cmpi ne, %27, %c0_i32_19 : i32
    scf.if %28 {
      %c0_20 = arith.constant 0 : index
      %c0_21 = arith.constant 0 : index
      %29 = vector.load %arg6[%c0_20, %c0_21] : memref<4x1xf32, #tpu.memory_space<vmem>>, vector<4x1xf32>
      %cst_22 = arith.constant 3.906250e-03 : f32
      %30 = vector.broadcast %cst_22 : f32 to vector<4x1xf32>
      %31 = arith.mulf %29, %30 : vector<4x1xf32>
      %c0_23 = arith.constant 0 : index
      %c0_24 = arith.constant 0 : index
      %32 = vector.load %arg8[%c0_23, %c0_24] : memref<4x1xf32, #tpu.memory_space<vmem>>, vector<4x1xf32>
      %cst_25 = arith.constant 3.906250e-03 : f32
      %33 = vector.broadcast %cst_25 : f32 to vector<4x1xf32>
      %34 = arith.mulf %32, %33 : vector<4x1xf32>
      %cst_26 = arith.constant 1.000000e+00 : f32
      %35 = arith.divf %cst_26, %5 : f32
      %36 = vector.broadcast %35 : f32 to vector<4x1xf32>
      %37 = math.powf %34, %36 : vector<4x1xf32>
      %c0_27 = arith.constant 0 : index
      %c0_28 = arith.constant 0 : index
      %c0_29 = arith.constant 0 : index
      %c0_30 = arith.constant 0 : index
      %38 = vector.load %arg5[%c0_27, %c0_28, %c0_29, %c0_30] : memref<1x3x4x1xf32, #tpu.memory_space<vmem>>, vector<1x1x4x1xf32>
      %39 = vector.shape_cast %38 : vector<1x1x4x1xf32> to vector<4x1xf32>
      %40 = vector.shape_cast %31 : vector<4x1xf32> to vector<1x1x4x1xf32>
      tpu.vector_store %arg5[%c0_27, %c0_28, %c0_29, %c0_30], %40 {strides = array<i32>} : memref<1x3x4x1xf32, #tpu.memory_space<vmem>>, vector<1x1x4x1xf32>,
      %c0_31 = arith.constant 0 : index
      %c0_32 = arith.constant 0 : index
      %41 = vector.load %arg7[%c0_31, %c0_32] : memref<4x1xf32, #tpu.memory_space<vmem>>, vector<4x1xf32>
      %c0_33 = arith.constant 0 : index
      %c1 = arith.constant 1 : index
      %c0_34 = arith.constant 0 : index
      %c0_35 = arith.constant 0 : index
      %42 = vector.load %arg5[%c0_33, %c1, %c0_34, %c0_35] : memref<1x3x4x1xf32, #tpu.memory_space<vmem>>, vector<1x1x4x1xf32>
      %43 = vector.shape_cast %42 : vector<1x1x4x1xf32> to vector<4x1xf32>
      %44 = vector.shape_cast %41 : vector<4x1xf32> to vector<1x1x4x1xf32>
      tpu.vector_store %arg5[%c0_33, %c1, %c0_34, %c0_35], %44 {strides = array<i32>} : memref<1x3x4x1xf32, #tpu.memory_space<vmem>>, vector<1x1x4x1xf32>,
      %c0_36 = arith.constant 0 : index
      %c2 = arith.constant 2 : index
      %c0_37 = arith.constant 0 : index
      %c0_38 = arith.constant 0 : index
      %45 = vector.load %arg5[%c0_36, %c2, %c0_37, %c0_38] : memref<1x3x4x1xf32, #tpu.memory_space<vmem>>, vector<1x1x4x1xf32>
      %46 = vector.shape_cast %45 : vector<1x1x4x1xf32> to vector<4x1xf32>
      %47 = vector.shape_cast %37 : vector<4x1xf32> to vector<1x1x4x1xf32>
      tpu.vector_store %arg5[%c0_36, %c2, %c0_37, %c0_38], %47 {strides = array<i32>} : memref<1x3x4x1xf32, #tpu.memory_space<vmem>>, vector<1x1x4x1xf32>,
    } else {
    }
    return
  }
  func.func @transform_0(%arg0: i32, %arg1: i32, %arg2: i32) -> i32 {
    %c0_i32 = arith.constant 0 : i32
    %c0_i32_0 = arith.constant 0 : i32
    return %c0_i32 : i32
  }
  func.func @transform_1(%arg0: i32, %arg1: i32, %arg2: i32) -> (i32, i32, i32) {
    %c0_i32 = arith.constant 0 : i32
    return %arg0, %arg1, %arg2 : i32, i32, i32
  }
  func.func @transform_2(%arg0: i32, %arg1: i32, %arg2: i32) -> (i32, i32, i32, i32) {
    %c0_i32 = arith.constant 0 : i32
    %c0_i32_0 = arith.constant 0 : i32
    %c0_i32_1 = arith.constant 0 : i32
    return %arg0, %c0_i32, %arg1, %c0_i32_0 : i32, i32, i32, i32
  }
}

</mosaic_0001>

<llo_original>
// kernel: tpu_custom_call.1
$region0: #{tpu_custom_call.1}
  #allocation0 [shape = 'u32[]', space=smem, size = 0x4, offset = 0x4, fixed_abs, tag = 'smem constant byte address 0x4 - core index']
  #allocation1 [shape = 'u32[144,128]{1,0:T(1,128)}', space=vmem, size = 0x12000, scoped, tag = 'internal scratch']
  #allocation2 [shape = 'f32[4,1]{1,0:T(4,128)}', space=vmem, size = 0x800, scoped, tag = 'scratch operand']
  #allocation3 [shape = 'f32[4,1]{1,0:T(4,128)}', space=vmem, size = 0x800, scoped, tag = 'scratch operand']
  #allocation4 [shape = 'f32[4,1]{1,0:T(4,128)}', space=vmem, size = 0x800, scoped, tag = 'scratch operand']
  #allocation5 [shape = 'f32[1]{0:T(128)S(6)}', space=smem, size = 0x200, scoped, tag = 'scoped memory for tpu_custom_call.1']
  %s0 = inlined_call_operand.<no memory space> [shape: f32[1], index: 0, kind: input, shape index: {}]
  %s1 = inlined_call_operand.hbm [shape: f32[2,4,256], index: 1, kind: input, shape index: {}]
  %s2 = inlined_call_operand.vmem [shape: f32[2,3,4,1], index: 2, kind: output, shape index: {}]
  %s3 = sld [smem:[#allocation0]]
  $region61: #{tpu_custom_call.1} parent=0
    _
  %s5 = ssub.s32 1, %s3
  %s6 = scalar_select 0, %s5, %s3
  %7 = sst [smem:[#allocation5]] %s0
  $region1: #{tpu_custom_call.1} parent=0
    #allocation6 [shape = 'u8[8192]{0}', space=vmem, size = 0x2000, scoped, tag = 'input window, operand 1']
    #allocation7 [shape = 's32[2]{0}', space=sflag, size = 0x8, scoped, tag = 'scoped memory for tpu_custom_call.1']
    %8 = vsyncpa [#allocation7], 0
    %s9 = scalar_lea.sflag [#allocation7], 1
    %10 = vsyncpa %s9, 0
    loop: start=0, step=1, limit=4
    $region2: #{tpu_custom_call.1} parent=1 // loop_pre_header
      _
    $region3: #{tpu_custom_call.1} parent=1 // loop_header
      %s12 = sphi 0, %s16
      %p13 = scmp.ge.s32.totalorder %s12, 4
      %s19 = sphi 0, %s38
      %s20 = sphi 0, %s34
      %s21 = sphi 0, %s30
      %s22 = sphi 0, %s19
      %s23 = sphi 0, %s20
      %s24 = sphi 0, %s21
      %s25 = sphi 0, %s22
      %s26 = sphi 0, %s23
      %s27 = sphi 0, %s24
      %s39 = sphi 0, %s39
      %s41 = sphi 0, %s39
      %s42 = sphi 0, %s41
      %s56 = sphi 0, %s42
      %s66 = sphi 0, %s68
      %s69 = sphi 0, %s66
      %s70 = sphi 0, %s69
      %s86 = sphi 0, %s70
      %s94 = sphi 0, %s96
      %s97 = sphi 0, %s94
      %s98 = sphi 0, %s97
      %s114 = sphi 0, %s98
    $region4: #{tpu_custom_call.1} parent=1 // loop_header_branch
      %15 = sbr.rel (%p13) target = $region8
    $region5: #{tpu_custom_call.1} parent=1 // loop_body
      %s17 = ssub.s32 %s12, 1
      %s18 = ssub.s32 %s12, 2
      %s28 = sadd.s32 1, %s21
      %p29 = scmp.ge.s32.totalorder %s28, 1
      %s30 = scalar_select %p29, 0, %s28
      %s31 = sadd.s32 1, %s20
      %s32 = scalar_select %p29, %s31, %s20
      %p33 = scmp.ge.s32.totalorder %s32, 1
      %s34 = scalar_select %p33, 0, %s32
      %s35 = sadd.s32 1, %s19
      %s36 = scalar_select %p33, %s35, %s19
      %p37 = scmp.ge.s32.totalorder %s36, 2
      %s38 = scalar_select %p37, 0, %s36
      %s40 = sadd.s32 %s39, 1
      %p43 = scmp.eq.s32.totalorder %s12, 1
      %p44 = scmp.ne.s32.totalorder %s39, %s41
      %p45 = scmp.eq.s32.totalorder %s12, 0
      %p46 = por %p44, %p45
      %p47 = scmp.ne.s32.totalorder %s39, %s41
      %p48 = scmp.eq.s32.totalorder %s17, 1
      %p49 = por %p47, %p48
      %p50 = scmp.ne.s32.totalorder %s41, %s42
      %p51 = scmp.eq.s32.totalorder %s17, 0
      %p52 = por %p50, %p51
      %p53 = scmp.ne.s32.totalorder %s41, %s42
      %p54 = scmp.eq.s32.totalorder %s18, 1
      %p55 = por %p53, %p54
      %p57 = scmp.ne.s32.totalorder %s42, %s56
      %p58 = scmp.eq.s32.totalorder %s18, 0
      %p59 = por %p57, %p58
      %s60 = ssub.s32 %s19, %s38
      %s61 = ssub.s32 %s20, %s34
      %s62 = sor.u32 %s60, %s61
      %s63 = ssub.s32 %s21, %s30
      %s64 = sor.u32 %s62, %s63
      %p65 = scmp.eq.s32.totalorder %s64, 0
      %s67 = sadd.s32 %s66, 1
      %s68 = scalar_select %p65, %s66, %s67
      %p71 = pneg %p65
      %p72 = scmp.eq.s32.totalorder %s12, 1
      %p73 = por %p71, %p72
      %p74 = scmp.ne.s32.totalorder %s66, %s69
      %p75 = scmp.eq.s32.totalorder %s12, 0
      %p76 = por %p74, %p75
      %p77 = scmp.ne.s32.totalorder %s66, %s69
      %p78 = scmp.eq.s32.totalorder %s17, 1
      %p79 = por %p77, %p78
      %p80 = scmp.ne.s32.totalorder %s69, %s70
      %p81 = scmp.eq.s32.totalorder %s17, 0
      %p82 = por %p80, %p81
      %p83 = scmp.ne.s32.totalorder %s69, %s70
      %p84 = scmp.eq.s32.totalorder %s18, 1
      %p85 = por %p83, %p84
      %p87 = scmp.ne.s32.totalorder %s70, %s86
      %p88 = scmp.eq.s32.totalorder %s18, 0
      %p89 = por %p87, %p88
      %s90 = ssub.s32 %s19, %s38
      %s91 = ssub.s32 %s20, %s34
      %s92 = sor.u32 %s90, %s91
      %p93 = scmp.eq.s32.totalorder %s92, 0
      %s95 = sadd.s32 %s94, 1
      %s96 = scalar_select %p93, %s94, %s95
      %p99 = pneg %p93
      %p100 = scmp.eq.s32.totalorder %s12, 1
      %p101 = por %p99, %p100
      %p102 = scmp.ne.s32.totalorder %s94, %s97
      %p103 = scmp.eq.s32.totalorder %s12, 0
      %p104 = por %p102, %p103
      %p105 = scmp.ne.s32.totalorder %s94, %s97
      %p106 = scmp.eq.s32.totalorder %s17, 1
      %p107 = por %p105, %p106
      %p108 = scmp.ne.s32.totalorder %s97, %s98
      %p109 = scmp.eq.s32.totalorder %s17, 0
      %p110 = por %p108, %p109
      %p111 = scmp.ne.s32.totalorder %s97, %s98
      %p112 = scmp.eq.s32.totalorder %s18, 1
      %p113 = por %p111, %p112
      %p115 = scmp.ne.s32.totalorder %s98, %s114
      %p116 = scmp.eq.s32.totalorder %s18, 0
      %p117 = por %p115, %p116
      %p118 = scmp.le.s32.totalorder 1, %s12
      %p119 = scmp.lt.s32.totalorder %s12, 3
      %p120 = pnand %p118, %p119
      %p121 = pneg %p120
      // Predicated region
      $region9: #{tpu_custom_call.1} parent=5 // pred_check
        _
      $region10: #{tpu_custom_call.1} parent=5 // pred_check_branch
        %123 = sbr.rel (%p120) target = $region12
      $region11: #{tpu_custom_call.1} parent=5 // pred_region
        %s124 = ssub.s32 %s12, 1
        // Predicated region
        $region13: #{tpu_custom_call.1} parent=11 // pred_check
          %p125 = pneg %p52
        $region14: #{tpu_custom_call.1} parent=11 // pred_check_branch
          %127 = sbr.rel (%p125) target = $region16
        $region15: #{tpu_custom_call.1} parent=11 // pred_region
          _
        $region16: #{tpu_custom_call.1} parent=11 // pred_fallthru
          _
      $region12: #{tpu_custom_call.1} parent=5 // pred_fallthru
        _
      %p128 = scmp.lt.s32.totalorder %s12, 2
      // Predicated region
      $region17: #{tpu_custom_call.1} parent=5 // pred_check
        %p129 = pneg %p128
      $region18: #{tpu_custom_call.1} parent=5 // pred_check_branch
        %131 = sbr.rel (%p129) target = $region20
      $region19: #{tpu_custom_call.1} parent=5 // pred_region
        // Predicated region
        $region21: #{tpu_custom_call.1} parent=19 // pred_check
          %p132 = pneg %p76
        $region22: #{tpu_custom_call.1} parent=19 // pred_check_branch
          %134 = sbr.rel (%p132) target = $region24
        $region23: #{tpu_custom_call.1} parent=19 // pred_region
          %s135 = sand.u32 %s66, 1
          %s136 = scalar_lea.sflag [#allocation7], %s135
          %s137 = sand.u32 %s66, 1
          %s138 = smul.addr %s137, 8
          %s139 = scalar_lea.vmem [#allocation6], %s138
          %s140 = smul.u32 2, %s21
          %s142 = ssub.s32 128, 128
          %143 = vsyncadd %s136, %s142
          %s144 = smul.addr %s20, 2
          %s145 = sadd.s32 %s140, %s144
          %s146 = smul.addr %s19, 2
          %s147 = sadd.s32 %s145, %s146
          %s148 = smul.addr %s147, 64
          %s149 = scalar_lea.hbm %s1, %s148
          %s151 = sshll.u32 %s139, 4
          %s152 = int_to_ptr.vmem [resolvable:$true] %s151
          %154 = dma.hbm_to_vmem [thread:$0]  %s149, 128, %s152, %s136
        $region24: #{tpu_custom_call.1} parent=19 // pred_fallthru
          _
      $region20: #{tpu_custom_call.1} parent=5 // pred_fallthru
        _
      %p155 = scmp.le.s32.totalorder 1, %s12
      %p156 = scmp.lt.s32.totalorder %s12, 3
      %p157 = pnand %p155, %p156
      %p158 = pneg %p157
      // Predicated region
      $region25: #{tpu_custom_call.1} parent=5 // pred_check
        _
      $region26: #{tpu_custom_call.1} parent=5 // pred_check_branch
        %160 = sbr.rel (%p157) target = $region28
      $region27: #{tpu_custom_call.1} parent=5 // pred_region
        %s161 = ssub.s32 %s12, 1
        %s162 = sand.u32 %s69, 1
        %s163 = scalar_lea.sflag [#allocation7], %s162
        %s164 = sand.u32 %s69, 1
        %s165 = smul.addr %s164, 8
        %s166 = scalar_lea.vmem [#allocation6], %s165
        // Predicated region
        $region29: #{tpu_custom_call.1} parent=27 // pred_check
          %p167 = pneg %p82
        $region30: #{tpu_custom_call.1} parent=27 // pred_check_branch
          %169 = sbr.rel (%p167) target = $region32
        $region31: #{tpu_custom_call.1} parent=27 // pred_region
          %170 = dma.done %s163, 128
        $region32: #{tpu_custom_call.1} parent=27 // pred_fallthru
          _
        %p171 = pneg %p52
        %p172 = pneg %p49
        %s173 = sand.u32 %s69, 1
        %s174 = scalar_lea.sflag [#allocation7], %s173
        %s175 = sand.u32 %s69, 1
        %s176 = smul.addr %s175, 8
        %s177 = scalar_lea.vmem [#allocation6], %s176
        %p178 = pneg %p82
        %p179 = pneg %p79
        %p180 = pneg %p110
        %p181 = pneg %p107
        %p182 = scmp.lt.s32.totalorder %s22, 1
        %s183 = scalar_select %p182, %s22, 1
        %p184 = scmp.lt.s32.totalorder %s23, 0
        %s185 = scalar_select %p184, %s23, 0
        %s186 = smul.addr %s183, 3
        %s187 = sadd.s32 %s185, %s186
        %s188 = smul.addr %s187, 4
        %s189 = scalar_lea.vmem %s2, %s188
        %s190 = smul.u32 2, %s24
        %p191 = scmp.lt.s32.totalorder %s22, 1
        %s192 = scalar_select %p191, %s22, 1
        %p193 = scmp.lt.s32.totalorder %s23, 0
        %s194 = scalar_select %p193, %s23, 0
        %s195 = smul.addr %s192, 3
        %s196 = sadd.s32 %s194, %s195
        %s197 = smul.addr %s196, 4
        %s198 = scalar_lea.vmem %s2, %s197
        %p199 = scmp.eq.s32.totalorder %s24, 0
        // Predicated region
        $region33: #{tpu_custom_call.1} parent=27 // pred_check
          %p200 = pneg %p199
        $region34: #{tpu_custom_call.1} parent=27 // pred_check_branch
          %202 = sbr.rel (%p200) target = $region36
        $region35: #{tpu_custom_call.1} parent=27 // pred_region
          %vm203 = vcmask 3072
          %204 = vst.msk [vmem:[#allocation2] sm:$0xf] %vm203, 0.0
          %205 = vst.msk [vmem:[#allocation3] sm:$0xf] %vm203, -inf
          %206 = vst.msk [vmem:[#allocation4] sm:$0xf] %vm203, 0.0
        $region36: #{tpu_custom_call.1} parent=27 // pred_fallthru
          _
        %v207 = vld [vmem:[%s166] sm:$0xff]
        %s208 = sld [smem:[#allocation5]]
        %v209 = vld [vmem:[#allocation2] sm:$0xf]
        %v211 = vcombine.high %v207, %v207
        %vm213 = vcmask 1043456
        %v214 = vsel %vm213, %v207, 0.0
        %v215 = vsel %vm213, %v211, 0.0
        %v216 = vadd.f32 %v214, %v215
        %217 = vadd.xlane.f32.xlu0 %v216
        %v218 = vpop.xlane.xlu0 %217
        %v219 = vadd.f32 %v209, %v218
        %vm220 = vcmask 3072
        %221 = vst.msk [vmem:[#allocation2] sm:$0xf] %vm220, %v219
        %v222 = vld [vmem:[#allocation3] sm:$0xf]
        %v223 = vsel %vm213, %v207, -inf
        %v224 = vsel %vm213, %v211, -inf
        %v225 = vmax.f32 %v223, %v224
        %226 = vmax.xlane.f32.xlu0 %v225
        %v227 = vpop.xlane.xlu0 %226
        %v228 = vmax.f32 %v222, %v227
        %229 = vst.msk [vmem:[#allocation3] sm:$0xf] %vm220, %v228
        %v230 = vmax.f32 %v207, 1e-06
        %s231 = ssub.f32 %s208, 3.0
        %s232 = sand.u32 2147483647, %s231
        %p233 = scmp.lt.f32.partialorder %s232, 1e-06
        // Predicated region
        $region37: #{tpu_custom_call.1} parent=27 // pred_check
          %p234 = pneg %p233
        $region38: #{tpu_custom_call.1} parent=27 // pred_check_branch
          %236 = sbr.rel (%p234) target = $region40
        $region39: #{tpu_custom_call.1} parent=27 // pred_region
          %v237 = vld [vmem:[#allocation4] sm:$0xf]
          %v238 = vmul.f32 %v230, %v230
          %v239 = vmul.f32 %v238, %v230
          %v241 = vcombine.high %v239, %v239
          %v243 = vsel %vm213, %v239, 0.0
          %v244 = vsel %vm213, %v241, 0.0
          %v245 = vadd.f32 %v243, %v244
          %246 = vadd.xlane.f32.xlu0 %v245
          %v247 = vpop.xlane.xlu0 %246
          %v248 = vadd.f32 %v237, %v247
          %249 = vst.msk [vmem:[#allocation4] sm:$0xf] %vm220, %v248
        $region40: #{tpu_custom_call.1} parent=27 // pred_fallthru
          _
        %p250 = pneg %p233
        // Predicated region
        $region41: #{tpu_custom_call.1} parent=27 // pred_check
          _
        $region42: #{tpu_custom_call.1} parent=27 // pred_check_branch
          %252 = sbr.rel (%p233) target = $region44
        $region43: #{tpu_custom_call.1} parent=27 // pred_region
          %v253 = vld [vmem:[#allocation4] sm:$0xf]
          %v254 = vstv %s208
          %v255 = vpow.f32 %v230, %v254
          %v257 = vcombine.high %v255, %v255
          %v259 = vsel %vm213, %v255, 0.0
          %v260 = vsel %vm213, %v257, 0.0
          %v261 = vadd.f32 %v259, %v260
          %262 = vadd.xlane.f32.xlu0 %v261
          %v263 = vpop.xlane.xlu0 %262
          %v264 = vadd.f32 %v253, %v263
          %265 = vst.msk [vmem:[#allocation4] sm:$0xf] %vm220, %v264
        $region44: #{tpu_custom_call.1} parent=27 // pred_fallthru
          _
        // Predicated region
        $region45: #{tpu_custom_call.1} parent=27 // pred_check
          %p266 = pneg %p199
        $region46: #{tpu_custom_call.1} parent=27 // pred_check_branch
          %268 = sbr.rel (%p266) target = $region48
        $region47: #{tpu_custom_call.1} parent=27 // pred_region
          %v269 = vld [vmem:[#allocation2] sm:$0xf]
          %v270 = vmul.f32 %v269, 0.00390625
          %v271 = vld [vmem:[#allocation4] sm:$0xf]
          %v272 = vmul.f32 %v271, 0.00390625
          %v273 = vstv %s208
          %v274 = vrcp.pop %v273
          %s275 = vtos %v274
          %v276 = vstv %s275
          %v277 = vpow.f32 %v272, %v276
          %278 = vst.msk [vmem:[%s198] sm:$0xf] %vm220, %v270
          %v279 = vld [vmem:[#allocation3] sm:$0xf]
          %s280 = scalar_lea.vmem %s198, 4
          %281 = vst.msk [vmem:[%s280] sm:$0xf] %vm220, %v279
          %s282 = scalar_lea.vmem %s198, 8
          %283 = vst.msk [vmem:[%s282] sm:$0xf] %vm220, %v277
        $region48: #{tpu_custom_call.1} parent=27 // pred_fallthru
          _
        %p284 = scmp.lt.s32.totalorder %s22, 1
        %s285 = scalar_select %p284, %s22, 1
        %p286 = scmp.lt.s32.totalorder %s23, 0
        %s287 = scalar_select %p286, %s23, 0
        %s288 = smul.addr %s285, 3
        %s289 = sadd.s32 %s287, %s288
        %s290 = smul.addr %s289, 4
        %s291 = scalar_lea.vmem %s2, %s290
        // Predicated region
        $region49: #{tpu_custom_call.1} parent=27 // pred_check
          %p292 = pneg %p107
        $region50: #{tpu_custom_call.1} parent=27 // pred_check_branch
          %294 = sbr.rel (%p292) target = $region52
        $region51: #{tpu_custom_call.1} parent=27 // pred_region
          _
        $region52: #{tpu_custom_call.1} parent=27 // pred_fallthru
          _
      $region28: #{tpu_custom_call.1} parent=5 // pred_fallthru
        _
      %p295 = scmp.le.s32.totalorder 2, %s12
      // Predicated region
      $region53: #{tpu_custom_call.1} parent=5 // pred_check
        %p296 = pneg %p295
      $region54: #{tpu_custom_call.1} parent=5 // pred_check_branch
        %298 = sbr.rel (%p296) target = $region56
      $region55: #{tpu_custom_call.1} parent=5 // pred_region
        %s299 = ssub.s32 %s12, 2
        // Predicated region
        $region57: #{tpu_custom_call.1} parent=55 // pred_check
          %p300 = pneg %p113
        $region58: #{tpu_custom_call.1} parent=55 // pred_check_branch
          %302 = sbr.rel (%p300) target = $region60
        $region59: #{tpu_custom_call.1} parent=55 // pred_region
          %p303 = scmp.lt.s32.totalorder %s25, 1
          %s304 = scalar_select %p303, %s25, 1
          %p305 = scmp.lt.s32.totalorder %s26, 0
          %s306 = scalar_select %p305, %s26, 0
          %s307 = smul.addr %s304, 3
          %s308 = sadd.s32 %s306, %s307
          %s309 = smul.addr %s308, 4
          %s310 = scalar_lea.vmem %s2, %s309
        $region60: #{tpu_custom_call.1} parent=55 // pred_fallthru
          _
      $region56: #{tpu_custom_call.1} parent=5 // pred_fallthru
        _
    $region6: #{tpu_custom_call.1} parent=1 // loop_footer
      %s16 = sadd.s32 1, %s12
    $region7: #{tpu_custom_call.1} parent=1 // loop_footer_branch
      %11 = sbr.rel target = $region3
    $region8: #{tpu_custom_call.1} parent=1 // loop_exit
      _
    %311 = vsyncpa [#allocation7], 1
    %s312 = scalar_lea.sflag [#allocation7], 1
    %313 = vsyncpa %s312, 1

</llo_original>
